<compile_context>
chip_gen: v7x
topology: tpu7x:2x2x1
jax: 0.10.0
libtpu: 0.0.40
codegen_flags: <defaults>
</compile_context>

<pallas_src>
import functools

import jax
import jax.numpy as jnp
from jax import lax
from jax.experimental import pallas as pl
from jax.experimental.pallas import tpu as pltpu


def _round_up(x, m):
    return ((x + m - 1) // m) * m


def _vmem_capacity_bytes():
    """Per-core VMEM capacity; conservative 64 MiB fallback (v7x) if the query fails."""
    try:
        info = pltpu.get_tpu_info()
        cap = getattr(info, "vmem_capacity_bytes", None)
        if cap:
            return int(cap)
    except Exception:
        pass
    return 64 << 20


# --------------------------- weight-resident path --------------------------------------------
def _layer_resident_kernel(x_ref, w_ref, p_ref, o_ref, *, d_valid, eps):
    xf = x_ref[...]                                              # (tm, Dp) bf16
    z = jnp.dot(xf, w_ref[...], preferred_element_type=jnp.float32)
    z = z + xf.astype(jnp.float32)                               # residual
    p = p_ref[...]                                               # (3, Dp) f32: bias/gamma/beta
    z = z + p[0:1, :]                                            # bias
    # LayerNorm over the valid lanes.  Padded lanes of z are exactly 0 (zero-padded x, weight
    # columns and bias), so full-width sums divided by d_valid are exact -> no lane mask.
    inv_d = jnp.float32(1.0 / d_valid)
    mean = jnp.sum(z, axis=-1, keepdims=True) * inv_d
    msq = jnp.sum(z * z, axis=-1, keepdims=True) * inv_d
    var = jnp.maximum(msq - mean * mean, jnp.float32(0.0))
    zn = (z - mean) * lax.rsqrt(var + jnp.float32(eps))
    o_ref[...] = (zn * p[1:2, :] + p[2:3, :]).astype(o_ref.dtype)


# --------------------------- K-tiled (weight-streaming) path ---------------------------------
def _layer_ktiled_kernel(xk_ref, w_ref, p_ref, o_ref, acc_ref, *, d_valid, tk, eps):
    # grid = (row_tiles, k_tiles); k (reduction over in_dim) is the trailing "arbitrary" axis.
    k = pl.program_id(1)
    nk = pl.num_programs(1)

    @pl.when(k == 0)
    def _():
        acc_ref[...] = jnp.zeros_like(acc_ref)

    xk = xk_ref[...]                                             # (tm, tk) bf16 K-chunk
    acc_ref[...] += jnp.dot(xk, w_ref[...], preferred_element_type=jnp.float32)
    # Residual fold: in_dim == out_dim, so this x K-chunk is exactly the residual contribution
    # to output lanes [k*tk, (k+1)*tk).  Offset is a multiple of 128 (lane-tile aligned).
    off = pl.multiple_of(k * tk, 128)
    acc_ref[:, pl.ds(off, tk)] += xk.astype(jnp.float32)

    @pl.when(k == nk - 1)
    def _():
        p = p_ref[...]
        z = acc_ref[...] + p[0:1, :]
        inv_d = jnp.float32(1.0 / d_valid)
        mean = jnp.sum(z, axis=-1, keepdims=True) * inv_d
        msq = jnp.sum(z * z, axis=-1, keepdims=True) * inv_d
        var = jnp.maximum(msq - mean * mean, jnp.float32(0.0))
        zn = (z - mean) * lax.rsqrt(var + jnp.float32(eps))
        o_ref[...] = (zn * p[1:2, :] + p[2:3, :]).astype(o_ref.dtype)


# --------------------------- tiling / path selection -----------------------------------------
def _choose_tiles(N, D, out_itemsize, vmem_cap):
    Dp = _round_up(D, 128)
    n16 = _round_up(max(N, 1), 16)                   # bf16 sublane packing
    budget = max(vmem_cap - (12 << 20), 16 << 20)    # headroom for compiler scratch / semaphores
    param_bytes = 2 * 3 * Dp * 4

    tm_cands = [1024, 768, 512, 384, 256, 128, 64, 32, 16]

    # Path 1: whole weight resident in VMEM (conservatively assume double-buffered allocation).
    w_res_bytes = 2 * Dp * Dp * 2
    min_tm_resident = min(128, n16)
    for tm_c in tm_cands:
        tm = min(tm_c, n16)
        if tm < min_tm_resident:
            break
        rowtile = (2 * tm * Dp * 2                    # x tile (bf16, double buffered)
                   + 2 * tm * Dp * out_itemsize       # output tile
                   + tm * Dp * 4)                     # f32 epilogue temporaries
        if w_res_bytes + param_bytes + rowtile <= budget:
            return dict(path="resident", tm=tm, tk=None, Dp=Dp,
                        vmem=w_res_bytes + param_bytes + rowtile)

    # Path 2: K-tiled weight streaming with an f32 accumulator.
    n_wbuf = 3 if vmem_cap >= (100 << 20) else 2      # deeper weight pipeline on 128 MiB parts
    tk_cands = [c for c in range(min(Dp, 2048), 0, -128) if Dp % c == 0]
    for tm_c in tm_cands:
        tm = min(tm_c, n16)
        for tk in tk_cands:
            total = (n_wbuf * tk * Dp * 2             # weight K-chunks
                     + 2 * tm * tk * 2                # x K-chunks
                     + tm * Dp * 4                    # f32 accumulator scratch
                     + 2 * tm * Dp * out_itemsize     # output tile
                     + param_bytes)
            if total <= budget:
                return dict(path="ktiled", tm=tm, tk=tk, Dp=Dp, vmem=total, n_wbuf=n_wbuf)

    # Last resort (tiny VMEM budget): smallest tiles.
    return dict(path="ktiled", tm=min(16, n16), tk=128, Dp=Dp, vmem=budget, n_wbuf=2)


def _weight_kspec(tk, Dp, bufs):
    idx = lambda i, k: (k, 0)
    if bufs > 2:
        try:
            return pl.BlockSpec((tk, Dp), idx, pipeline_mode=pl.Buffered(bufs))
        except TypeError:
            pass
    return pl.BlockSpec((tk, Dp), idx)


# --------------------------- wrapper ----------------------------------------------------------
def layer_forward(x, w, b, gamma, beta, *, eps=1e-5, out_dtype=jnp.bfloat16):
    """x: [N, D] bf16; w: (out_dim, in_dim) bf16; b: (D,) bf16; gamma/beta: (D,) f32."""
    N, D = x.shape
    assert w.shape == (D, D), "residual `linear(src) + src` requires in_dim == out_dim"
    assert b.shape == (D,) and gamma.shape == (D,) and beta.shape == (D,)

    out_itemsize = jnp.dtype(out_dtype).itemsize
    cap = _vmem_capacity_bytes()
    cfg = _choose_tiles(N, D, out_itemsize, cap)
    tm, Dp = cfg["tm"], cfg["Dp"]
    Np = _round_up(N, tm)

    # Zero-pad only when needed (skip an extra HBM read+write round trip when aligned).
    # Zero padding keeps matmul / residual / LN math exact for the valid region.
    if (Np, Dp) == (N, D):
        xp = x
    else:
        xp = jnp.zeros((Np, Dp), x.dtype).at[:N, :D].set(x)

    wt = w.T                                         # (in_dim, out_dim)
    if Dp != D:
        wt = jnp.zeros((Dp, Dp), w.dtype).at[:D, :D].set(wt)
    # TODO(synk): if the weight is static across calls, hoist this transpose/pad out of the
    # per-call path (e.g. store the pre-transposed padded weight once).

    # Pack bias / gamma / beta into a single (3, Dp) f32 input (one DMA instead of three).
    params = jnp.zeros((3, Dp), jnp.float32)
    params = params.at[0, :D].set(b.astype(jnp.float32))
    params = params.at[1, :D].set(gamma.astype(jnp.float32))
    params = params.at[2, :D].set(beta.astype(jnp.float32))

    vmem_limit = int(min(cap - (4 << 20), cfg["vmem"] + (8 << 20)))
    vmem_limit = max(vmem_limit, 16 << 20)

    if cfg["path"] == "resident":
        grid = (Np // tm,)
        kernel = functools.partial(_layer_resident_kernel, d_valid=D, eps=eps)
        in_specs = [
            pl.BlockSpec((tm, Dp), lambda i: (i, 0)),        # x row tile (LHS + residual)
            pl.BlockSpec((Dp, Dp), lambda i: (0, 0)),        # weight, VMEM-resident
            pl.BlockSpec((3, Dp), lambda i: (0, 0)),         # packed bias/gamma/beta
        ]
        out_specs = pl.BlockSpec((tm, Dp), lambda i: (i, 0))
        scratch_shapes = []
        dim_sem = ("parallel",)
        bytes_accessed = Np * Dp * 2 + Dp * Dp * 2 + 3 * Dp * 4 + Np * Dp * out_itemsize
    else:
        tk = cfg["tk"]
        grid = (Np // tm, Dp // tk)
        kernel = functools.partial(_layer_ktiled_kernel, d_valid=D, tk=tk, eps=eps)
        in_specs = [
            pl.BlockSpec((tm, tk), lambda i, k: (i, k)),     # x K-chunk (LHS + residual fold)
            _weight_kspec(tk, Dp, cfg["n_wbuf"]),            # weight K-chunk
            pl.BlockSpec((3, Dp), lambda i, k: (0, 0)),      # packed bias/gamma/beta
        ]
        out_specs = pl.BlockSpec((tm, Dp), lambda i, k: (i, 0))
        scratch_shapes = [pltpu.VMEM((tm, Dp), jnp.float32)]
        dim_sem = ("parallel", "arbitrary")
        bytes_accessed = (Np * Dp * 2                        # x read once (as K-chunks)
                          + (Np // tm) * Dp * Dp * 2         # weight re-streamed per row tile
                          + 3 * Dp * 4
                          + Np * Dp * out_itemsize)

    flops = 2 * Np * Dp * Dp + 10 * Np * Dp

    out = pl.pallas_call(
        kernel,
        out_shape=jax.ShapeDtypeStruct((Np, Dp), out_dtype),
        grid_spec=pltpu.PrefetchScalarGridSpec(
            num_scalar_prefetch=0,
            grid=grid,
            in_specs=in_specs,
            out_specs=out_specs,
            scratch_shapes=scratch_shapes,
        ),
        compiler_params=pltpu.CompilerParams(
            dimension_semantics=dim_sem,
            vmem_limit_bytes=vmem_limit,
        ),
        cost_estimate=pl.CostEstimate(
            flops=int(flops), transcendentals=int(Np), bytes_accessed=int(bytes_accessed)),
    )(xp, wt, params)

    if (Np, Dp) != (N, D):
        out = out[:N, :D]
    return out


if __name__ == "__main__":
    # Residual requires in_dim == out_dim.
    batch, seq, hidden = 2, 8, 32
    key = jax.random.PRNGKey(0)
    kx, kw, kb = jax.random.split(key, 3)

    # Deterministic synthetic parameters (not a checkpoint load).
    x = jax.random.normal(kx, (batch, seq, hidden), dtype=jnp.float32).astype(jnp.bfloat16)
    w = (jax.random.normal(kw, (hidden, hidden), dtype=jnp.float32) * 0.05).astype(jnp.bfloat16)
    b = (jax.random.normal(kb, (hidden,), dtype=jnp.float32) * 0.05).astype(jnp.bfloat16)
    gamma = jnp.ones((hidden,), dtype=jnp.float32)   # nn.LayerNorm default init
    beta = jnp.zeros((hidden,), dtype=jnp.float32)

    x2d = x.reshape(batch * seq, hidden)
    out = layer_forward(x2d, w, b, gamma, beta)
    jax.block_until_ready(out)
    out3 = out.reshape(batch, seq, hidden)

    # Pure-JAX f32 reference: norm(linear(src) + src)
    xf = x2d.astype(jnp.float32)
    z = xf @ w.T.astype(jnp.float32) + b.astype(jnp.float32) + xf
    mu = z.mean(-1, keepdims=True)
    var = ((z - mu) ** 2).mean(-1, keepdims=True)
    ref = (z - mu) * lax.rsqrt(var + 1e-5) * gamma + beta

    assert jnp.allclose(out.astype(jnp.float32), ref, atol=3e-2, rtol=3e-2), \
        "kernel output mismatch vs reference"
    print("KERNEL_OK")
</pallas_src>

<mosaic_0001>
module attributes {stable_mosaic.version = 11 : i64} {
  func.func @_layer_resident_kernel(%arg0: i32, %arg1: memref<16x128xbf16, #tpu.memory_space<vmem>>, %arg2: memref<128x128xbf16, #tpu.memory_space<vmem>>, %arg3: memref<3x128xf32, #tpu.memory_space<vmem>>, %arg4: memref<16x128xbf16, #tpu.memory_space<vmem>>) attributes {dimension_semantics = [#tpu.dimension_semantics<parallel>], iteration_bounds = array<i64: 1>, scalar_prefetch = 0 : i64, scratch_operands = 0 : i64, tpu.core_type = #tpu.core_type<tc>, window_params = [{transform_indices = @transform_0, window_bounds = array<i64: 16, 128>}, {pipeline_mode = #tpu.pipeline_mode<synchronous>, transform_indices = @transform_1, window_bounds = array<i64: 128, 128>}, {pipeline_mode = #tpu.pipeline_mode<synchronous>, transform_indices = @transform_2, window_bounds = array<i64: 3, 128>}, {transform_indices = @transform_3, window_bounds = array<i64: 16, 128>}]} {
    %c0 = arith.constant 0 : index
    %c0_0 = arith.constant 0 : index
    %0 = vector.load %arg1[%c0, %c0_0] : memref<16x128xbf16, #tpu.memory_space<vmem>>, vector<16x128xbf16>
    %c0_1 = arith.constant 0 : index
    %c0_2 = arith.constant 0 : index
    %1 = vector.load %arg2[%c0_1, %c0_2] : memref<128x128xbf16, #tpu.memory_space<vmem>>, vector<128x128xbf16>
    %cst = arith.constant dense<0.000000e+00> : vector<16x128xf32>
    %2 = tpu.matmul %0, %1, %cst {dimension_numbers = #tpu.dot_dimension_numbers<[1], [0], [0], [1], [0, 0, 1, 1], [], []>} : vector<16x128xbf16>, vector<128x128xbf16>, vector<16x128xf32> -> vector<16x128xf32>
    %3 = arith.extf %0 : vector<16x128xbf16> to vector<16x128xf32>
    %4 = arith.addf %2, %3 : vector<16x128xf32>
    %c0_3 = arith.constant 0 : index
    %c0_4 = arith.constant 0 : index
    %5 = vector.load %arg3[%c0_3, %c0_4] : memref<3x128xf32, #tpu.memory_space<vmem>>, vector<3x128xf32>
    %6 = vector.extract_strided_slice %5 {offsets = [0, 0], sizes = [1, 128], strides = [1, 1]} : vector<3x128xf32> to vector<1x128xf32>
    %7 = vector.broadcast %6 : vector<1x128xf32> to vector<16x128xf32>
    %8 = arith.addf %4, %7 : vector<16x128xf32>
    %cst_5 = arith.constant dense<0.000000e+00> : vector<16xf32>
    %9 = vector.multi_reduction <add>, %8, %cst_5 [1] : vector<16x128xf32> to vector<16xf32>
    %10 = vector.shape_cast %9 : vector<16xf32> to vector<16x1xf32>
    %cst_6 = arith.constant 3.125000e-02 : f32
    %11 = vector.broadcast %cst_6 : f32 to vector<16x1xf32>
    %12 = arith.mulf %10, %11 : vector<16x1xf32>
    %13 = arith.mulf %8, %8 : vector<16x128xf32>
    %cst_7 = arith.constant dense<0.000000e+00> : vector<16xf32>
    %14 = vector.multi_reduction <add>, %13, %cst_7 [1] : vector<16x128xf32> to vector<16xf32>
    %15 = vector.shape_cast %14 : vector<16xf32> to vector<16x1xf32>
    %cst_8 = arith.constant 3.125000e-02 : f32
    %16 = vector.broadcast %cst_8 : f32 to vector<16x1xf32>
    %17 = arith.mulf %15, %16 : vector<16x1xf32>
    %18 = arith.mulf %12, %12 : vector<16x1xf32>
    %19 = arith.subf %17, %18 : vector<16x1xf32>
    %cst_9 = arith.constant 0.000000e+00 : f32
    %20 = vector.broadcast %cst_9 : f32 to vector<16x1xf32>
    %21 = arith.maximumf %19, %20 : vector<16x1xf32>
    %22 = vector.broadcast %12 : vector<16x1xf32> to vector<16x128xf32>
    %23 = arith.subf %8, %22 : vector<16x128xf32>
    %cst_10 = arith.constant 9.99999974E-6 : f32
    %24 = vector.broadcast %cst_10 : f32 to vector<16x1xf32>
    %25 = arith.addf %21, %24 : vector<16x1xf32>
    %26 = math.rsqrt %25 : vector<16x1xf32>
    %27 = vector.broadcast %26 : vector<16x1xf32> to vector<16x128xf32>
    %28 = arith.mulf %23, %27 : vector<16x128xf32>
    %29 = vector.extract_strided_slice %5 {offsets = [1, 0], sizes = [1, 128], strides = [1, 1]} : vector<3x128xf32> to vector<1x128xf32>
    %30 = vector.broadcast %29 : vector<1x128xf32> to vector<16x128xf32>
    %31 = arith.mulf %28, %30 : vector<16x128xf32>
    %32 = vector.extract_strided_slice %5 {offsets = [2, 0], sizes = [1, 128], strides = [1, 1]} : vector<3x128xf32> to vector<1x128xf32>
    %33 = vector.broadcast %32 : vector<1x128xf32> to vector<16x128xf32>
    %34 = arith.addf %31, %33 : vector<16x128xf32>
    %35 = arith.truncf %34 : vector<16x128xf32> to vector<16x128xbf16>
    %c0_11 = arith.constant 0 : index
    %c0_12 = arith.constant 0 : index
    %36 = vector.load %arg4[%c0_11, %c0_12] : memref<16x128xbf16, #tpu.memory_space<vmem>>, vector<16x128xbf16>
    tpu.vector_store %arg4[%c0_11, %c0_12], %35 {strides = array<i32>} : memref<16x128xbf16, #tpu.memory_space<vmem>>, vector<16x128xbf16>,
    return
  }
  func.func @transform_0(%arg0: i32) -> (i32, i32) {
    %c0_i32 = arith.constant 0 : i32
    %c0_i32_0 = arith.constant 0 : i32
    return %arg0, %c0_i32 : i32, i32
  }
  func.func @transform_1(%arg0: i32) -> (i32, i32) {
    %c0_i32 = arith.constant 0 : i32
    %c0_i32_0 = arith.constant 0 : i32
    %c0_i32_1 = arith.constant 0 : i32
    return %c0_i32, %c0_i32_0 : i32, i32
  }
  func.func @transform_2(%arg0: i32) -> (i32, i32) {
    %c0_i32 = arith.constant 0 : i32
    %c0_i32_0 = arith.constant 0 : i32
    %c0_i32_1 = arith.constant 0 : i32
    return %c0_i32, %c0_i32_0 : i32, i32
  }
  func.func @transform_3(%arg0: i32) -> (i32, i32) {
    %c0_i32 = arith.constant 0 : i32
    %c0_i32_0 = arith.constant 0 : i32
    return %arg0, %c0_i32 : i32, i32
  }
}

</mosaic_0001>

<llo_original>
// kernel: tpu_custom_call.1
$region0: #{tpu_custom_call.1}
  #allocation0 [shape = 'u32[]', space=smem, size = 0x4, offset = 0x4, fixed_abs, tag = 'smem constant byte address 0x4 - core index']
  #allocation1 [shape = 'u32[144,128]{1,0:T(1,128)}', space=vmem, size = 0x12000, scoped, tag = 'internal scratch']
  %s0 = inlined_call_operand.hbm [shape: bf16[16,128], index: 0, kind: input, shape index: {}]
  %s1 = inlined_call_operand.hbm [shape: bf16[128,128], index: 1, kind: input, shape index: {}]
  %s2 = inlined_call_operand.vmem [shape: f32[3,128], index: 2, kind: input, shape index: {}]
  %s3 = inlined_call_operand.hbm [shape: bf16[16,128], index: 3, kind: output, shape index: {}]
  %s4 = sld [smem:[#allocation0]]
  $region30: #{tpu_custom_call.1} parent=0
    _
  %s6 = ssub.s32 1, %s4
  %s7 = scalar_select 0, %s6, %s4
  $region1: #{tpu_custom_call.1} parent=0
    #allocation2 [shape = 'u8[4096]{0}', space=vmem, size = 0x1000, scoped, tag = 'input window, operand 0, single buffered']
    #allocation3 [shape = 's32[1]{0}', space=sflag, size = 0x4, scoped, tag = 'scoped memory for tpu_custom_call.1']
    #allocation4 [shape = 's32[1]{0}', space=sflag, size = 0x4, scoped, tag = 'scoped memory for tpu_custom_call.1']
    #allocation5 [shape = 'u8[32768]{0}', space=vmem, size = 0x8000, scoped, tag = 'input window, operand 1, single buffered']
    #allocation6 [shape = 's32[1]{0}', space=sflag, size = 0x4, scoped, tag = 'scoped memory for tpu_custom_call.1']
    #allocation7 [shape = 'u8[4096]{0}', space=vmem, size = 0x1000, scoped, tag = 'output window, operand 0, single buffered']
    %8 = vsyncpa [#allocation3], 0
    %9 = vsyncpa [#allocation6], 0
    %10 = vsyncpa [#allocation4], 0
    // Predicated region
    $region2: #{tpu_custom_call.1} parent=1 // pred_check
      _
    $region3: #{tpu_custom_call.1} parent=1 // pred_check_branch
      %12 = sbr.rel (0) target = $region5
    $region4: #{tpu_custom_call.1} parent=1 // pred_region
      %s14 = ssub.s32 128, 128
      %15 = vsyncadd [#allocation3], %s14
      %s16 = sshll.u32 [#allocation2], 4
      %s17 = int_to_ptr.vmem [resolvable:$true] %s16
      %22 = dma.hbm_to_vmem [thread:$0]  %s0, 128, %s17, [#allocation3], 64, 64, 4
    $region5: #{tpu_custom_call.1} parent=1 // pred_fallthru
      _
    // Predicated region
    $region6: #{tpu_custom_call.1} parent=1 // pred_check
      _
    $region7: #{tpu_custom_call.1} parent=1 // pred_check_branch
      %24 = sbr.rel (0) target = $region9
    $region8: #{tpu_custom_call.1} parent=1 // pred_region
      %s26 = ssub.s32 1024, 1024
      %27 = vsyncadd [#allocation6], %s26
      %s28 = sshll.u32 [#allocation5], 4
      %s29 = int_to_ptr.vmem [resolvable:$true] %s28
      %34 = dma.hbm_to_vmem [thread:$0]  %s1, 1024, %s29, [#allocation6], 64, 64, 4
    $region9: #{tpu_custom_call.1} parent=1 // pred_fallthru
      _
    // Predicated region
    $region10: #{tpu_custom_call.1} parent=1 // pred_check
      _
    $region11: #{tpu_custom_call.1} parent=1 // pred_check_branch
      %36 = sbr.rel (0) target = $region13
    $region12: #{tpu_custom_call.1} parent=1 // pred_region
      _
    $region13: #{tpu_custom_call.1} parent=1 // pred_fallthru
      _
    // Predicated region
    $region14: #{tpu_custom_call.1} parent=1 // pred_check
      _
    $region15: #{tpu_custom_call.1} parent=1 // pred_check_branch
      %38 = sbr.rel (0) target = $region17
    $region16: #{tpu_custom_call.1} parent=1 // pred_region
      %39 = dma.done [#allocation3], 128
    $region17: #{tpu_custom_call.1} parent=1 // pred_fallthru
      _
    // Predicated region
    $region18: #{tpu_custom_call.1} parent=1 // pred_check
      _
    $region19: #{tpu_custom_call.1} parent=1 // pred_check_branch
      %41 = sbr.rel (0) target = $region21
    $region20: #{tpu_custom_call.1} parent=1 // pred_region
      %42 = dma.done [#allocation6], 1024
    $region21: #{tpu_custom_call.1} parent=1 // pred_fallthru
      _
    %v44 = vld [vmem:[#allocation2] sm:$0xf]
    %v45 = vld [vmem:[#allocation2 + $0x4] sm:$0xf]
    %v46 = vld [vmem:[#allocation5] sm:$0xf]
    %v47 = vld [vmem:[#allocation5 + $0x4] sm:$0xf]
    %v48 = vld [vmem:[#allocation5 + $0x8] sm:$0xf]
    %v49 = vld [vmem:[#allocation5 + $0xc] sm:$0xf]
    %v50 = vld [vmem:[#allocation5 + $0x10] sm:$0xf]
    %v51 = vld [vmem:[#allocation5 + $0x14] sm:$0xf]
    %v52 = vld [vmem:[#allocation5 + $0x18] sm:$0xf]
    %v53 = vld [vmem:[#allocation5 + $0x1c] sm:$0xf]
    %v54 = vld [vmem:[#allocation5 + $0x20] sm:$0xf]
    %v55 = vld [vmem:[#allocation5 + $0x24] sm:$0xf]
    %v56 = vld [vmem:[#allocation5 + $0x28] sm:$0xf]
    %v57 = vld [vmem:[#allocation5 + $0x2c] sm:$0xf]
    %v58 = vld [vmem:[#allocation5 + $0x30] sm:$0xf]
    %v59 = vld [vmem:[#allocation5 + $0x34] sm:$0xf]
    %v60 = vld [vmem:[#allocation5 + $0x38] sm:$0xf]
    %v61 = vld [vmem:[#allocation5 + $0x3c] sm:$0xf]
    %v62 = vunpack.c.l.bf16 %v44
    %v63 = vunpack.c.l.bf16 %v45
    %v66 = vunpack.c.l.b16 %v44
    %v67 = vunpack.c.l.b16 %v45
    %v68 = vpack.c.b16 %v67, %v66
    %v86 = vunpack.c.l.b16 %v46
    %v87 = vunpack.c.l.b16 %v47
    %v88 = vunpack.c.l.b16 %v48
    %v89 = vunpack.c.l.b16 %v49
    %v90 = vunpack.c.l.b16 %v50
    %v91 = vunpack.c.l.b16 %v51
    %v92 = vunpack.c.l.b16 %v52
    %v93 = vunpack.c.l.b16 %v53
    %v94 = vunpack.c.l.b16 %v54
    %v95 = vunpack.c.l.b16 %v55
    %v96 = vunpack.c.l.b16 %v56
    %v97 = vunpack.c.l.b16 %v57
    %v98 = vunpack.c.l.b16 %v58
    %v99 = vunpack.c.l.b16 %v59
    %v100 = vunpack.c.l.b16 %v60
    %v101 = vunpack.c.l.b16 %v61
    %v102 = vpack.c.b16 %v87, %v86
    %v103 = vpack.c.b16 %v89, %v88
    %v104 = vpack.c.b16 %v91, %v90
    %v105 = vpack.c.b16 %v93, %v92
    %v106 = vpack.c.b16 %v95, %v94
    %v107 = vpack.c.b16 %v97, %v96
    %v108 = vpack.c.b16 %v99, %v98
    %v109 = vpack.c.b16 %v101, %v100
    %118 = vmatprep.subr.bf16.mxu0 0
    %119 = vmatpush1.bf16.msra.mxu0 %v102
    %120 = vmatprep.subr.bf16.mxu0 0
    %121 = vmatpush1.bf16.msra.mxu0 %v103
    %122 = vmatprep.subr.bf16.mxu0 0
    %123 = vmatpush1.bf16.msra.mxu0 %v104
    %124 = vmatprep.subr.bf16.mxu0 0
    %125 = vmatpush1.bf16.msra.mxu0 %v105
    %126 = vmatprep.subr.bf16.mxu0 0
    %127 = vmatpush1.bf16.msra.mxu0 %v106
    %128 = vmatprep.subr.bf16.mxu0 0
    %129 = vmatpush1.bf16.msra.mxu0 %v107
    %130 = vmatprep.subr.bf16.mxu0 0
    %131 = vmatpush1.bf16.msra.mxu0 %v108
    %132 = vmatprep.subr.bf16.mxu0 0
    %133 = vmatpush1.bf16.msra.mxu0 %v109
    %134 = vmatprep.subr.bf16.mxu0 0
    %135 = vmatpush1.bf16.msra.mxu0 0
    %136 = vmatprep.subr.bf16.mxu0 0
    %137 = vmatpush1.bf16.msra.mxu0 0
    %138 = vmatprep.subr.bf16.mxu0 0
    %139 = vmatpush1.bf16.msra.mxu0 0
    %140 = vmatprep.subr.bf16.mxu0 0
    %141 = vmatpush1.bf16.msra.mxu0 0
    %142 = vmatprep.subr.bf16.mxu0 0
    %143 = vmatpush1.bf16.msra.mxu0 0
    %144 = vmatprep.subr.bf16.mxu0 0
    %145 = vmatpush1.bf16.msra.mxu0 0
    %146 = vmatprep.subr.bf16.mxu0 0
    %147 = vmatpush1.bf16.msra.mxu0 0
    %148 = vmatprep.subr.bf16.mxu0 0
    %149 = vmatpush1.bf16.msra.mxu0 0
    %150 = vmatprep.mubr.bf16.mxu0 0
    %151 = vmatmul.mubr.bf16.gmra.mrb[0].mxu0 %v68
    %v152 = vpop.f32.mrb[0].mxu0
    %v153 = vadd.f32 %v62, %v152
    %v154 = vpop.f32.mrb[0].mxu0
    %v155 = vpop.f32.mrb[0].mxu0
    %v156 = vadd.f32 %v63, %v155
    %v157 = vpop.f32.mrb[0].mxu0
    %158 = vdwg.mxu0
    %v159 = vld [vmem:[%s2] sm:$0x7]
    %v160 = vlaneseq
    %v161 = vshrl.u32 %v160, 7
    %v162 = vsub.s32 0, %v161
    %v163 = vrot.slane %v159, %v162
    %v164 = vadd.f32 %v153, %v163
    %v165 = vadd.f32 %v156, %v163
    %166 = vadd.xlane.f32.xlu0 %v164
    %v167 = vpop.xlane.xlu0 %166
    %168 = vadd.xlane.f32.xlu0 %v165
    %v169 = vpop.xlane.xlu0 %168
    %v170 = vmul.f32 %v167, 0.03125
    %v171 = vmul.f32 %v169, 0.03125
    %v172 = vmul.f32 %v164, %v164
    %v173 = vmul.f32 %v165, %v165
    %174 = vadd.xlane.f32.xlu0 %v172
    %v175 = vpop.xlane.xlu0 %174
    %176 = vadd.xlane.f32.xlu0 %v173
    %v177 = vpop.xlane.xlu0 %176
    %v178 = vmul.f32 %v175, 0.03125
    %v179 = vmul.f32 %v177, 0.03125
    %v180 = vmul.f32 %v170, %v170
    %v181 = vmul.f32 %v171, %v171
    %v182 = vsub.f32 %v178, %v180
    %v183 = vsub.f32 %v179, %v181
    %v184 = vmax.f32 %v182, 0.0
    %v185 = vmax.f32 %v183, 0.0
    %v186 = vsub.f32 %v164, %v170
    %v187 = vsub.f32 %v165, %v171
    %v188 = vadd.f32 %v184, 1e-05
    %v189 = vadd.f32 %v185, 1e-05
    %v190 = vrsqrt.pop %v188
    %v191 = vrsqrt.pop %v189
    %v192 = vmul.f32 %v186, %v190
    %v193 = vmul.f32 %v187, %v191
    %v194 = vlaneseq
    %v195 = vshrl.u32 %v194, 7
    %v196 = vsub.s32 1, %v195
    %v197 = vrot.slane %v159, %v196
    %v198 = vmul.f32 %v192, %v197
    %v199 = vmul.f32 %v193, %v197
    %v200 = vlaneseq
    %v201 = vshrl.u32 %v200, 7
    %v202 = vsub.s32 2, %v201
    %v203 = vrot.slane %v159, %v202
    %v204 = vadd.f32 %v198, %v203
    %v205 = vadd.f32 %v199, %v203
    %v206 = vpack.c.bf16 %v205, %v204
    %v208 = vunpack.c.l.b16 %v206
    %v209 = vunpack.c.h.b16 %v206
    %v210 = vpack.c.b16 %v208, %v208
    %v211 = vpack.c.b16 %v209, %v209
    %214 = vst [vmem:[#allocation7] sm:$0xf] %v210
    %215 = vst [vmem:[#allocation7 + $0x4] sm:$0xf] %v211
    // Predicated region
    $region22: #{tpu_custom_call.1} parent=1 // pred_check
      _
    $region23: #{tpu_custom_call.1} parent=1 // pred_check_branch
      %217 = sbr.rel (0) target = $region25
    $region24: #{tpu_custom_call.1} parent=1 // pred_region
      %s219 = ssub.s32 128, 128
      %220 = vsyncadd [#allocation4], %s219
      %s221 = sshll.u32 [#allocation7], 4
      %s222 = int_to_ptr.vmem [resolvable:$true] %s221
      %227 = dma.vmem_to_hbm [thread:$0]  %s222, 128, %s3, [#allocation4], 64, 64, 4
    $region25: #{tpu_custom_call.1} parent=1 // pred_fallthru
      _
    // Predicated region
    $region26: #{tpu_custom_call.1} parent=1 // pred_check
      _
    $region27: #{tpu_custom_call.1} parent=1 // pred_check_branch
      %229 = sbr.rel (0) target = $region29
    $region28: #{tpu_custom_call.1} parent=1 // pred_region
      %230 = dma.done [#allocation4], 128
    $region29: #{tpu_custom_call.1} parent=1 // pred_fallthru
      _
    %231 = vsyncpa [#allocation3], 1
    %232 = vsyncpa [#allocation6], 1
    %233 = vsyncpa [#allocation4], 1

</llo_original>
